<compile_context>
chip_gen: v5e
topology: v5e:2x2
jax: 0.10.0
libtpu: 0.0.40
codegen_flags: <defaults>
</compile_context>

<pallas_src>
import math

import jax
import jax.numpy as jnp
import numpy as np
from jax.experimental import pallas as pl
from jax.experimental.pallas import tpu as pltpu


def llama3_scaled_inv_freq(dim, base=500000.0, factor=8.0, low_freq_factor=1.0,
                           high_freq_factor=4.0,
                           original_max_position_embeddings=8192):
    """One-time fp32 inv_freq buffer (the module's lazily-cached `self.inv_freq`)."""
    exponents = np.arange(0, dim, 2, dtype=np.float32) / np.float32(dim)
    inv_freq = (1.0 / np.power(np.float32(base), exponents)).astype(np.float32)
    low_freq_wavelen = original_max_position_embeddings / low_freq_factor
    high_freq_wavelen = original_max_position_embeddings / high_freq_factor
    wavelen = 2.0 * math.pi / inv_freq
    smooth = (original_max_position_embeddings / wavelen - low_freq_factor) / (
        high_freq_factor - low_freq_factor)
    scaled = np.where(
        wavelen < high_freq_wavelen,
        inv_freq,
        np.where(wavelen > low_freq_wavelen,
                 inv_freq / factor,
                 (1.0 - smooth) * inv_freq / factor + smooth * inv_freq),
    ).astype(np.float32)
    return jnp.asarray(scaled)


def _rope_kernel(inv_freq_ref, pos_ref, cos_ref, sin_ref):
    # inv_freq_ref: (1, half)       fp32, resident across the whole grid
    # pos_ref:      (TM, 1)         positions for this row tile (int or float)
    # cos_ref/sin_ref: (TM, 2*half) outputs in x.dtype (lane-dense last dim)
    pos = pos_ref[...].astype(jnp.float32)              # (TM, 1)
    inv = inv_freq_ref[...]                              # (1, half)
    freqs = pos * inv                                    # (TM, half) broadcast mul
    c = jnp.cos(freqs)                                   # EUP work on half width only
    s = jnp.sin(freqs)
    cos_ref[...] = jnp.concatenate([c, c], axis=-1).astype(cos_ref.dtype)
    sin_ref[...] = jnp.concatenate([s, s], axis=-1).astype(sin_ref.dtype)


def llama3_rotary_embedding(x, position_ids, inv_freq, *, tm=512):
    """x: [B, S, ...] (dtype source only); position_ids: [B, S]; inv_freq: [dim//2] fp32.

    Returns (cos, sin), each [B, S, dim] in x.dtype.
    """
    B, S = position_ids.shape
    half = inv_freq.shape[0]
    dim = 2 * half
    M = B * S

    pos2d = position_ids.reshape(M, 1)                   # row-major reshape is free
    inv2d = inv_freq.reshape(1, half).astype(jnp.float32)

    if M <= tm:
        tile_m = M        # single block == full array extent (always legal)
    else:
        tile_m = tm       # multiple of 8; partial last block handled by Pallas
    grid = (pl.cdiv(M, tile_m),)

    cos2d, sin2d = pl.pallas_call(
        _rope_kernel,
        out_shape=(jax.ShapeDtypeStruct((M, dim), x.dtype),
                   jax.ShapeDtypeStruct((M, dim), x.dtype)),
        grid_spec=pltpu.PrefetchScalarGridSpec(
            num_scalar_prefetch=0,
            grid=grid,
            in_specs=[
                pl.BlockSpec((1, half), lambda i: (0, 0)),      # inv_freq (resident)
                pl.BlockSpec((tile_m, 1), lambda i: (i, 0)),    # positions
            ],
            out_specs=(
                pl.BlockSpec((tile_m, dim), lambda i: (i, 0)),  # cos
                pl.BlockSpec((tile_m, dim), lambda i: (i, 0)),  # sin
            ),
        ),
        compiler_params=pltpu.CompilerParams(
            dimension_semantics=("parallel",),
        ),
    )(inv2d, pos2d)

    return cos2d.reshape(B, S, dim), sin2d.reshape(B, S, dim)


def _reference(x, position_ids, inv_freq):
    pos = position_ids.astype(jnp.float32)                   # [B, S]
    freqs = pos[..., None] * inv_freq[None, None, :]         # [B, S, half]
    emb = jnp.concatenate([freqs, freqs], axis=-1)           # [B, S, dim]
    return jnp.cos(emb).astype(x.dtype), jnp.sin(emb).astype(x.dtype)


if __name__ == "__main__":
    # Small shapes consistent with the module: batch=2, seq=8, head_dim=32.
    B, S, dim = 2, 8, 32
    key = jax.random.PRNGKey(0)
    kx, kp = jax.random.split(key, 2)

    x = jax.random.normal(kx, (B, S, dim), dtype=jnp.float32)
    position_ids = jax.random.randint(kp, (B, S), 0, 8192, dtype=jnp.int32)

    inv_freq = llama3_scaled_inv_freq(dim)   # computed once (== cached buffer)

    cos, sin = llama3_rotary_embedding(x, position_ids, inv_freq)
    cos, sin = jax.block_until_ready((cos, sin))

    cos_ref, sin_ref = _reference(x, position_ids, inv_freq)
    assert cos.shape == (B, S, dim) and sin.shape == (B, S, dim)
    assert jnp.allclose(cos, cos_ref, atol=1e-5, rtol=1e-5), "cos mismatch"
    assert jnp.allclose(sin, sin_ref, atol=1e-5, rtol=1e-5), "sin mismatch"

    # TODO(synk): the module's lazy per-element Python loop that builds self.inv_freq
    # is a one-time host-side buffer init; it is implemented vectorized in fp32 in
    # llama3_scaled_inv_freq() rather than inside the kernel.
    print("KERNEL_OK")
</pallas_src>

<mosaic_0001>
module attributes {stable_mosaic.version = 11 : i64} {
  func.func @_rope_kernel(%arg0: i32, %arg1: memref<1x16xf32, #tpu.memory_space<vmem>>, %arg2: memref<16x1xi32, #tpu.memory_space<vmem>>, %arg3: memref<16x32xf32, #tpu.memory_space<vmem>>, %arg4: memref<16x32xf32, #tpu.memory_space<vmem>>) attributes {dimension_semantics = [#tpu.dimension_semantics<parallel>], iteration_bounds = array<i64: 1>, scalar_prefetch = 0 : i64, scratch_operands = 0 : i64, tpu.core_type = #tpu.core_type<tc>, window_params = [{pipeline_mode = #tpu.pipeline_mode<synchronous>, transform_indices = @transform_0, window_bounds = array<i64: 1, 16>}, {transform_indices = @transform_1, window_bounds = array<i64: 16, 1>}, {transform_indices = @transform_2, window_bounds = array<i64: 16, 32>}, {transform_indices = @transform_3, window_bounds = array<i64: 16, 32>}]} {
    %c0 = arith.constant 0 : index
    %c0_0 = arith.constant 0 : index
    %0 = vector.load %arg2[%c0, %c0_0] : memref<16x1xi32, #tpu.memory_space<vmem>>, vector<16x1xi32>
    %1 = arith.sitofp %0 : vector<16x1xi32> to vector<16x1xf32>
    %c0_1 = arith.constant 0 : index
    %c0_2 = arith.constant 0 : index
    %2 = vector.load %arg1[%c0_1, %c0_2] : memref<1x16xf32, #tpu.memory_space<vmem>>, vector<1x16xf32>
    %3 = vector.broadcast %1 : vector<16x1xf32> to vector<16x16xf32>
    %4 = vector.broadcast %2 : vector<1x16xf32> to vector<16x16xf32>
    %5 = arith.mulf %3, %4 : vector<16x16xf32>
    %6 = math.cos %5 : vector<16x16xf32>
    %7 = math.sin %5 : vector<16x16xf32>
    %8 = tpu.concatenate %6, %6 in 1 : vector<16x16xf32>, vector<16x16xf32> -> vector<16x32xf32>
    %c0_3 = arith.constant 0 : index
    %c0_4 = arith.constant 0 : index
    %9 = vector.load %arg3[%c0_3, %c0_4] : memref<16x32xf32, #tpu.memory_space<vmem>>, vector<16x32xf32>
    tpu.vector_store %arg3[%c0_3, %c0_4], %8 {strides = array<i32>} : memref<16x32xf32, #tpu.memory_space<vmem>>, vector<16x32xf32>,
    %10 = tpu.concatenate %7, %7 in 1 : vector<16x16xf32>, vector<16x16xf32> -> vector<16x32xf32>
    %c0_5 = arith.constant 0 : index
    %c0_6 = arith.constant 0 : index
    %11 = vector.load %arg4[%c0_5, %c0_6] : memref<16x32xf32, #tpu.memory_space<vmem>>, vector<16x32xf32>
    tpu.vector_store %arg4[%c0_5, %c0_6], %10 {strides = array<i32>} : memref<16x32xf32, #tpu.memory_space<vmem>>, vector<16x32xf32>,
    return
  }
  func.func @transform_0(%arg0: i32) -> (i32, i32) {
    %c0_i32 = arith.constant 0 : i32
    %c0_i32_0 = arith.constant 0 : i32
    %c0_i32_1 = arith.constant 0 : i32
    return %c0_i32, %c0_i32_0 : i32, i32
  }
  func.func @transform_1(%arg0: i32) -> (i32, i32) {
    %c0_i32 = arith.constant 0 : i32
    %c0_i32_0 = arith.constant 0 : i32
    return %arg0, %c0_i32 : i32, i32
  }
  func.func @transform_2(%arg0: i32) -> (i32, i32) {
    %c0_i32 = arith.constant 0 : i32
    %c0_i32_0 = arith.constant 0 : i32
    return %arg0, %c0_i32 : i32, i32
  }
  func.func @transform_3(%arg0: i32) -> (i32, i32) {
    %c0_i32 = arith.constant 0 : i32
    %c0_i32_0 = arith.constant 0 : i32
    return %arg0, %c0_i32 : i32, i32
  }
}

</mosaic_0001>

<llo_original>
// kernel: tpu_custom_call.1
$region0: #{tpu_custom_call.1}
  #allocation0 [shape = 'u32[]', space=smem, size = 0x4, offset = 0x4, fixed_abs, tag = 'smem constant byte address 0x4 - core index']
  #allocation1 [shape = 'u32[72,128]{1,0:T(1,128)}', space=vmem, size = 0x9000, scoped, tag = 'internal scratch']
  %s0 = inlined_call_operand.vmem [shape: f32[1,16], index: 0, kind: input, shape index: {}]
  %s1 = inlined_call_operand.vmem [shape: s32[16,1], index: 1, kind: input, shape index: {}]
  %s2 = inlined_call_operand.hbm [shape: f32[16,32], index: 2, kind: output, shape index: {0}]
  %s3 = inlined_call_operand.hbm [shape: f32[16,32], index: 3, kind: output, shape index: {1}]
  %4 = xla_tuple %s2, %s3
  %s5 = sld [smem:[#allocation0]]
  $region26: #{tpu_custom_call.1} parent=0
    _
  %s7 = ssub.s32 1, %s5
  %s8 = scalar_select 0, %s7, %s5
  $region1: #{tpu_custom_call.1} parent=0
    #allocation2 [shape = 'u8[8192]{0}', space=vmem, size = 0x2000, scoped, tag = 'output window, operand 0, single buffered']
    #allocation3 [shape = 's32[1]{0}', space=sflag, size = 0x4, scoped, tag = 'scoped memory for tpu_custom_call.1']
    #allocation4 [shape = 'u8[8192]{0}', space=vmem, size = 0x2000, scoped, tag = 'output window, operand 1, single buffered']
    #allocation5 [shape = 's32[1]{0}', space=sflag, size = 0x4, scoped, tag = 'scoped memory for tpu_custom_call.1']
    %9 = vsyncpa [#allocation3], 0
    %10 = vsyncpa [#allocation5], 0
    // Predicated region
    $region2: #{tpu_custom_call.1} parent=1 // pred_check
      _
    $region3: #{tpu_custom_call.1} parent=1 // pred_check_branch
      %12 = sbr.rel (0) target = $region5
    $region4: #{tpu_custom_call.1} parent=1 // pred_region
      _
    $region5: #{tpu_custom_call.1} parent=1 // pred_fallthru
      _
    // Predicated region
    $region6: #{tpu_custom_call.1} parent=1 // pred_check
      _
    $region7: #{tpu_custom_call.1} parent=1 // pred_check_branch
      %14 = sbr.rel (0) target = $region9
    $region8: #{tpu_custom_call.1} parent=1 // pred_region
      _
    $region9: #{tpu_custom_call.1} parent=1 // pred_fallthru
      _
    %v15 = vld [vmem:[%s1] sm:$0xff]
    %v16 = vld [vmem:[%s1 + $0x8] sm:$0xff]
    %v17 = vcvt.s32.f32 %v15
    %v18 = vcvt.s32.f32 %v16
    %v19 = vld [vmem:[%s0] sm:$0x1]
    %21 = vset.pattern.permute.xlu0 0
    %22 = vperm.xlu0 %21, %v17
    %v23 = vpop.permute.xlu0 %22
    %26 = vset.pattern.permute.xlu0 0
    %27 = vperm.xlu0 %26, %v18
    %v28 = vpop.permute.xlu0 %27
    %v31 = vperm.slane %v19, 0
    %v33 = vmul.f32 %v23, %v31
    %v34 = vmul.f32 %v28, %v31
    %v35 = vand.u32 2147483647, %v33
    %vm36 = vcmp.le.f32.partialorder %v35, 0.7853982
    %vm37 = vcmp.lt.s32.totalorder %v33, 0
    %v38 = vand.u32 %v33, 2139095040
    %v39 = vshrl.u32 %v38, 23
    %v40 = vsub.s32 %v39, 127
    %v41 = vand.u32 2147483647, %v33
    %v42 = vand.u32 %v41, 8388607
    %v43 = vor.u32 %v42, 8388608
    %v44 = vsub.s32 0, %v43
    %v45 = vadd.s32 %v40, 1
    %vm46 = vcmp.gt.s32.totalorder %v45, 0
    %v47 = vsel %vm46, %v45, 0
    %v48 = vshrl.u32 %v47, 5
    %v49 = vand.u32 %v47, 31
    %v50 = vsub.s32 32, %v49
    %v51 = vshrl.u32 683565275, %v50
    %v52 = vshll.u32 683565275, %v49
    %v53 = vshrl.u32 2475754826, %v50
    %v54 = vor.u32 %v52, %v53
    %v55 = vshll.u32 2475754826, %v49
    %v56 = vshrl.u32 2131351028, %v50
    %v57 = vor.u32 %v55, %v56
    %v58 = vshll.u32 2131351028, %v49
    %v59 = vshrl.u32 2102212464, %v50
    %v60 = vor.u32 %v58, %v59
    %v61 = vshll.u32 2102212464, %v49
    %v62 = vshrl.u32 920167782, %v50
    %v63 = vor.u32 %v61, %v62
    %v64 = vshll.u32 920167782, %v49
    %v65 = vshrl.u32 1326507024, %v50
    %v66 = vor.u32 %v64, %v65
    %vm67 = vcmp.lt.s32.totalorder %v48, 1
    %vm68 = vcmp.lt.s32.totalorder %v48, 2
    %vm69 = vcmp.lt.s32.totalorder %v48, 3
    %vm70 = vcmp.lt.s32.totalorder %v48, 4
    %v71 = vsel %vm67, %v51, %v54
    %v72 = vsel %vm70, %v60, 2102212464
    %v73 = vsel %vm69, %v57, %v72
    %v74 = vsel %vm68, %v71, %v73
    %v75 = vsel %vm67, %v54, %v57
    %v76 = vsel %vm70, %v63, 920167782
    %v77 = vsel %vm69, %v60, %v76
    %v78 = vsel %vm68, %v75, %v77
    %v79 = vsel %vm67, %v57, %v60
    %v80 = vsel %vm70, %v66, 1326507024
    %v81 = vsel %vm69, %v63, %v80
    %v82 = vsel %vm68, %v79, %v81
    %v83 = vshll.u32 %v43, 8
    %v84 = vand.u32 %v83, 65535
    %v85 = vshrl.u32 %v83, 16
    %v86 = vand.u32 %v82, 65535
    %v87 = vshrl.u32 %v82, 16
    %v88 = vmul.u32 %v84, %v86
    %v89 = vmul.u32 %v84, %v87
    %v90 = vmul.u32 %v85, %v86
    %v91 = vmul.u32 %v85, %v87
    %v92 = vshll.u32 %v89, 16
    %v93 = vshrl.u32 %v89, 16
    %v94 = vshll.u32 %v90, 16
    %v95 = vshrl.u32 %v90, 16
    %vm96 = vc.u32 %v88, %v92
    %v97 = vsel %vm96, 1, 0
    %v98 = vadd.s32 %v88, %v92
    %v99 = vadd.s32 %v91, %v97
    %vm100 = vc.u32 %v98, %v94
    %v101 = vsel %vm100, 1, 0
    %v102 = vadd.s32 %v98, %v94
    %v103 = vadd.s32 %v99, %v101
    %v104 = vadd.s32 %v103, %v93
    %v105 = vadd.s32 %v104, %v95
    %v106 = vand.u32 %v83, 65535
    %v107 = vshrl.u32 %v83, 16
    %v108 = vand.u32 %v78, 65535
    %v109 = vshrl.u32 %v78, 16
    %v110 = vmul.u32 %v106, %v108
    %v111 = vmul.u32 %v106, %v109
    %v112 = vmul.u32 %v107, %v108
    %v113 = vmul.u32 %v107, %v109
    %v114 = vshll.u32 %v111, 16
    %v115 = vshrl.u32 %v111, 16
    %v116 = vshll.u32 %v112, 16
    %v117 = vshrl.u32 %v112, 16
    %vm118 = vc.u32 %v110, %v114
    %v119 = vsel %vm118, 1, 0
    %v120 = vadd.s32 %v110, %v114
    %v121 = vadd.s32 %v113, %v119
    %vm122 = vc.u32 %v120, %v116
    %v123 = vsel %vm122, 1, 0
    %v124 = vadd.s32 %v120, %v116
    %v125 = vadd.s32 %v121, %v123
    %v126 = vadd.s32 %v125, %v115
    %v127 = vadd.s32 %v126, %v117
    %v128 = vmul.u32 %v83, %v74
    %v129 = vadd.s32 %v105, %v124
    %vm130 = vc.u32 %v105, %v124
    %v131 = vadd.s32 %v127, 1
    %v132 = vsel %vm130, %v131, %v127
    %v133 = vadd.s32 %v128, %v132
    %v134 = vadd.s32 %v133, 536870912
    %v135 = vshrl.u32 %v134, 30
    %v136 = vshll.u32 %v135, 30
    %v137 = vsub.s32 %v133, %v136
    %vm138 = vcmp.lt.s32.totalorder %v137, 0
    %v139 = vsub.s32 0, %v137
    %v140 = vsel %vm138, %v139, %v137
    %v141 = vclz %v140
    %v142 = vsub.s32 %v141, 2
    %vm143 = vcmp.gt.s32.totalorder 0, %v142
    %v144 = vsel %vm143, 0, %v142
    %v145 = vsub.s32 32, %v144
    %v146 = vshll.u32 %v137, %v144
    %v147 = vshrl.u32 %v129, %v145
    %v148 = vor.u32 %v146, %v147
    %v149 = vsub.s32 4294967266, %v144
    %v150 = vadd.s32 %v149, 127
    %v151 = vshll.u32 %v150, 23
    %v152 = vor.u32 4788187, %v151
    %v153 = vand.u32 2147483647, %v152
    %v155 = vcvt.s32.f32 %v148
    %v156 = vmul.f32 %v155, %v153
    %v157 = vxor.u32 %v156, 2147483648
    %v158 = vsel %vm37, %v157, %v156
    %v159 = vsub.s32 4, %v135
    %v160 = vsel %vm37, %v159, %v135
    %v161 = vsel %vm36, %v33, %v158
    %v162 = vsel %vm36, 0, %v160
    %v163 = vmul.f32 %v161, %v161
    %v164 = vmul.f32 %v163, -0.001358992
    %v165 = vadd.f32 %v164, 0.041655596
    %v166 = vmul.f32 %v163, %v165
    %v167 = vadd.f32 %v166, -0.4999988
    %v168 = vmul.f32 %v163, %v167
    %v169 = vadd.f32 1.0, %v168
    %v170 = vmul.f32 %v161, %v161
    %v171 = vmul.f32 %v170, -0.00019511016
    %v172 = vadd.f32 %v171, 0.008332121
    %v173 = vmul.f32 %v170, %v172
    %v174 = vadd.f32 %v173, -0.16666654
    %v175 = vmul.f32 %v170, %v174
    %v176 = vadd.f32 %v175, 1.0
    %v177 = vmul.f32 %v176, %v161
    %vm178 = vweird.f32 %v33
    %v179 = vand.u32 %v162, 3
    %vm180 = vcmp.lt.s32.totalorder %v179, 2
    %vm181 = vcmp.eq.s32.totalorder %v179, 0
    %v182 = vxor.u32 %v177, 2147483648
    %v183 = vsel %vm181, %v169, %v182
    %vm184 = vcmp.eq.s32.totalorder %v179, 2
    %v185 = vxor.u32 %v169, 2147483648
    %v186 = vsel %vm184, %v185, %v177
    %v187 = vsel %vm180, %v183, %v186
    %v188 = vsel %vm178, nan, %v187
    %v189 = vand.u32 2147483647, %v34
    %vm190 = vcmp.le.f32.partialorder %v189, 0.7853982
    %vm191 = vcmp.lt.s32.totalorder %v34, 0
    %v192 = vand.u32 %v34, 2139095040
    %v193 = vshrl.u32 %v192, 23
    %v194 = vsub.s32 %v193, 127
    %v195 = vand.u32 2147483647, %v34
    %v196 = vand.u32 %v195, 8388607
    %v197 = vor.u32 %v196, 8388608
    %v198 = vsub.s32 0, %v197
    %v199 = vadd.s32 %v194, 1
    %vm200 = vcmp.gt.s32.totalorder %v199, 0
    %v201 = vsel %vm200, %v199, 0
    %v202 = vshrl.u32 %v201, 5
    %v203 = vand.u32 %v201, 31
    %v204 = vsub.s32 32, %v203
    %v205 = vshrl.u32 683565275, %v204
    %v206 = vshll.u32 683565275, %v203
    %v207 = vshrl.u32 2475754826, %v204
    %v208 = vor.u32 %v206, %v207
    %v209 = vshll.u32 2475754826, %v203
    %v210 = vshrl.u32 2131351028, %v204
    %v211 = vor.u32 %v209, %v210
    %v212 = vshll.u32 2131351028, %v203
    %v213 = vshrl.u32 2102212464, %v204
    %v214 = vor.u32 %v212, %v213
    %v215 = vshll.u32 2102212464, %v203
    %v216 = vshrl.u32 920167782, %v204
    %v217 = vor.u32 %v215, %v216
    %v218 = vshll.u32 920167782, %v203
    %v219 = vshrl.u32 1326507024, %v204
    %v220 = vor.u32 %v218, %v219
    %vm221 = vcmp.lt.s32.totalorder %v202, 1
    %vm222 = vcmp.lt.s32.totalorder %v202, 2
    %vm223 = vcmp.lt.s32.totalorder %v202, 3
    %vm224 = vcmp.lt.s32.totalorder %v202, 4
    %v225 = vsel %vm221, %v205, %v208
    %v226 = vsel %vm224, %v214, 2102212464
    %v227 = vsel %vm223, %v211, %v226
    %v228 = vsel %vm222, %v225, %v227
    %v229 = vsel %vm221, %v208, %v211
    %v230 = vsel %vm224, %v217, 920167782
    %v231 = vsel %vm223, %v214, %v230
    %v232 = vsel %vm222, %v229, %v231
    %v233 = vsel %vm221, %v211, %v214
    %v234 = vsel %vm224, %v220, 1326507024
    %v235 = vsel %vm223, %v217, %v234
    %v236 = vsel %vm222, %v233, %v235
    %v237 = vshll.u32 %v197, 8
    %v238 = vand.u32 %v237, 65535
    %v239 = vshrl.u32 %v237, 16
    %v240 = vand.u32 %v236, 65535
    %v241 = vshrl.u32 %v236, 16
    %v242 = vmul.u32 %v238, %v240
    %v243 = vmul.u32 %v238, %v241
    %v244 = vmul.u32 %v239, %v240
    %v245 = vmul.u32 %v239, %v241
    %v246 = vshll.u32 %v243, 16
    %v247 = vshrl.u32 %v243, 16
    %v248 = vshll.u32 %v244, 16
    %v249 = vshrl.u32 %v244, 16
    %vm250 = vc.u32 %v242, %v246
    %v251 = vsel %vm250, 1, 0
    %v252 = vadd.s32 %v242, %v246
    %v253 = vadd.s32 %v245, %v251
    %vm254 = vc.u32 %v252, %v248
    %v255 = vsel %vm254, 1, 0
    %v256 = vadd.s32 %v252, %v248
    %v257 = vadd.s32 %v253, %v255
    %v258 = vadd.s32 %v257, %v247
    %v259 = vadd.s32 %v258, %v249
    %v260 = vand.u32 %v237, 65535
    %v261 = vshrl.u32 %v237, 16
    %v262 = vand.u32 %v232, 65535
    %v263 = vshrl.u32 %v232, 16
    %v264 = vmul.u32 %v260, %v262
    %v265 = vmul.u32 %v260, %v263
    %v266 = vmul.u32 %v261, %v262
    %v267 = vmul.u32 %v261, %v263
    %v268 = vshll.u32 %v265, 16
    %v269 = vshrl.u32 %v265, 16
    %v270 = vshll.u32 %v266, 16
    %v271 = vshrl.u32 %v266, 16
    %vm272 = vc.u32 %v264, %v268
    %v273 = vsel %vm272, 1, 0
    %v274 = vadd.s32 %v264, %v268
    %v275 = vadd.s32 %v267, %v273
    %vm276 = vc.u32 %v274, %v270
    %v277 = vsel %vm276, 1, 0
    %v278 = vadd.s32 %v274, %v270
    %v279 = vadd.s32 %v275, %v277
    %v280 = vadd.s32 %v279, %v269
    %v281 = vadd.s32 %v280, %v271
    %v282 = vmul.u32 %v237, %v228
    %v283 = vadd.s32 %v259, %v278
    %vm284 = vc.u32 %v259, %v278
    %v285 = vadd.s32 %v281, 1
    %v286 = vsel %vm284, %v285, %v281
    %v287 = vadd.s32 %v282, %v286
    %v288 = vadd.s32 %v287, 536870912
    %v289 = vshrl.u32 %v288, 30
    %v290 = vshll.u32 %v289, 30
    %v291 = vsub.s32 %v287, %v290
    %vm292 = vcmp.lt.s32.totalorder %v291, 0
    %v293 = vsub.s32 0, %v291
    %v294 = vsel %vm292, %v293, %v291
    %v295 = vclz %v294
    %v296 = vsub.s32 %v295, 2
    %vm297 = vcmp.gt.s32.totalorder 0, %v296
    %v298 = vsel %vm297, 0, %v296
    %v299 = vsub.s32 32, %v298
    %v300 = vshll.u32 %v291, %v298
    %v301 = vshrl.u32 %v283, %v299
    %v302 = vor.u32 %v300, %v301
    %v303 = vsub.s32 4294967266, %v298
    %v304 = vadd.s32 %v303, 127
    %v305 = vshll.u32 %v304, 23
    %v306 = vor.u32 4788187, %v305
    %v307 = vand.u32 2147483647, %v306
    %v309 = vcvt.s32.f32 %v302
    %v310 = vmul.f32 %v309, %v307
    %v311 = vxor.u32 %v310, 2147483648
    %v312 = vsel %vm191, %v311, %v310
    %v313 = vsub.s32 4, %v289
    %v314 = vsel %vm191, %v313, %v289
    %v315 = vsel %vm190, %v34, %v312
    %v316 = vsel %vm190, 0, %v314
    %v317 = vmul.f32 %v315, %v315
    %v318 = vmul.f32 %v317, -0.001358992
    %v319 = vadd.f32 %v318, 0.041655596
    %v320 = vmul.f32 %v317, %v319
    %v321 = vadd.f32 %v320, -0.4999988
    %v322 = vmul.f32 %v317, %v321
    %v323 = vadd.f32 1.0, %v322
    %v324 = vmul.f32 %v315, %v315
    %v325 = vmul.f32 %v324, -0.00019511016
    %v326 = vadd.f32 %v325, 0.008332121
    %v327 = vmul.f32 %v324, %v326
    %v328 = vadd.f32 %v327, -0.16666654
    %v329 = vmul.f32 %v324, %v328
    %v330 = vadd.f32 %v329, 1.0
    %v331 = vmul.f32 %v330, %v315
    %vm332 = vweird.f32 %v34
    %v333 = vand.u32 %v316, 3
    %vm334 = vcmp.lt.s32.totalorder %v333, 2
    %vm335 = vcmp.eq.s32.totalorder %v333, 0
    %v336 = vxor.u32 %v331, 2147483648
    %v337 = vsel %vm335, %v323, %v336
    %vm338 = vcmp.eq.s32.totalorder %v333, 2
    %v339 = vxor.u32 %v323, 2147483648
    %v340 = vsel %vm338, %v339, %v331
    %v341 = vsel %vm334, %v337, %v340
    %v342 = vsel %vm332, nan, %v341
    %v343 = vand.u32 2147483647, %v33
    %vm344 = vcmp.le.f32.partialorder %v343, 0.7853982
    %vm345 = vcmp.lt.s32.totalorder %v33, 0
    %v346 = vand.u32 %v33, 2139095040
    %v347 = vshrl.u32 %v346, 23
    %v348 = vsub.s32 %v347, 127
    %v349 = vand.u32 2147483647, %v33
    %v350 = vand.u32 %v349, 8388607
    %v351 = vor.u32 %v350, 8388608
    %v352 = vsub.s32 0, %v351
    %v353 = vadd.s32 %v348, 1
    %vm354 = vcmp.gt.s32.totalorder %v353, 0
    %v355 = vsel %vm354, %v353, 0
    %v356 = vshrl.u32 %v355, 5
    %v357 = vand.u32 %v355, 31
    %v358 = vsub.s32 32, %v357
    %v359 = vshrl.u32 683565275, %v358
    %v360 = vshll.u32 683565275, %v357
    %v361 = vshrl.u32 2475754826, %v358
    %v362 = vor.u32 %v360, %v361
    %v363 = vshll.u32 2475754826, %v357
    %v364 = vshrl.u32 2131351028, %v358
    %v365 = vor.u32 %v363, %v364
    %v366 = vshll.u32 2131351028, %v357
    %v367 = vshrl.u32 2102212464, %v358
    %v368 = vor.u32 %v366, %v367
    %v369 = vshll.u32 2102212464, %v357
    %v370 = vshrl.u32 920167782, %v358
    %v371 = vor.u32 %v369, %v370
    %v372 = vshll.u32 920167782, %v357
    %v373 = vshrl.u32 1326507024, %v358
    %v374 = vor.u32 %v372, %v373
    %vm375 = vcmp.lt.s32.totalorder %v356, 1
    %vm376 = vcmp.lt.s32.totalorder %v356, 2
    %vm377 = vcmp.lt.s32.totalorder %v356, 3
    %vm378 = vcmp.lt.s32.totalorder %v356, 4
    %v379 = vsel %vm375, %v359, %v362
    %v380 = vsel %vm378, %v368, 2102212464
    %v381 = vsel %vm377, %v365, %v380
    %v382 = vsel %vm376, %v379, %v381
    %v383 = vsel %vm375, %v362, %v365
    %v384 = vsel %vm378, %v371, 920167782
    %v385 = vsel %vm377, %v368, %v384
    %v386 = vsel %vm376, %v383, %v385
    %v387 = vsel %vm375, %v365, %v368
    %v388 = vsel %vm378, %v374, 1326507024
    %v389 = vsel %vm377, %v371, %v388
    %v390 = vsel %vm376, %v387, %v389
    %v391 = vshll.u32 %v351, 8
    %v392 = vand.u32 %v391, 65535
    %v393 = vshrl.u32 %v391, 16
    %v394 = vand.u32 %v390, 65535
    %v395 = vshrl.u32 %v390, 16
    %v396 = vmul.u32 %v392, %v394
    %v397 = vmul.u32 %v392, %v395
    %v398 = vmul.u32 %v393, %v394
    %v399 = vmul.u32 %v393, %v395
    %v400 = vshll.u32 %v397, 16
    %v401 = vshrl.u32 %v397, 16
    %v402 = vshll.u32 %v398, 16
    %v403 = vshrl.u32 %v398, 16
    %vm404 = vc.u32 %v396, %v400
    %v405 = vsel %vm404, 1, 0
    %v406 = vadd.s32 %v396, %v400
    %v407 = vadd.s32 %v399, %v405
    %vm408 = vc.u32 %v406, %v402
    %v409 = vsel %vm408, 1, 0
    %v410 = vadd.s32 %v406, %v402
    %v411 = vadd.s32 %v407, %v409
    %v412 = vadd.s32 %v411, %v401
    %v413 = vadd.s32 %v412, %v403
    %v414 = vand.u32 %v391, 65535
    %v415 = vshrl.u32 %v391, 16
    %v416 = vand.u32 %v386, 65535
    %v417 = vshrl.u32 %v386, 16
    %v418 = vmul.u32 %v414, %v416
    %v419 = vmul.u32 %v414, %v417
    %v420 = vmul.u32 %v415, %v416
    %v421 = vmul.u32 %v415, %v417
    %v422 = vshll.u32 %v419, 16
    %v423 = vshrl.u32 %v419, 16
    %v424 = vshll.u32 %v420, 16
    %v425 = vshrl.u32 %v420, 16
    %vm426 = vc.u32 %v418, %v422
    %v427 = vsel %vm426, 1, 0
    %v428 = vadd.s32 %v418, %v422
    %v429 = vadd.s32 %v421, %v427
    %vm430 = vc.u32 %v428, %v424
    %v431 = vsel %vm430, 1, 0
    %v432 = vadd.s32 %v428, %v424
    %v433 = vadd.s32 %v429, %v431
    %v434 = vadd.s32 %v433, %v423
    %v435 = vadd.s32 %v434, %v425
    %v436 = vmul.u32 %v391, %v382
    %v437 = vadd.s32 %v413, %v432
    %vm438 = vc.u32 %v413, %v432
    %v439 = vadd.s32 %v435, 1
    %v440 = vsel %vm438, %v439, %v435
    %v441 = vadd.s32 %v436, %v440
    %v442 = vadd.s32 %v441, 536870912
    %v443 = vshrl.u32 %v442, 30
    %v444 = vshll.u32 %v443, 30
    %v445 = vsub.s32 %v441, %v444
    %vm446 = vcmp.lt.s32.totalorder %v445, 0
    %v447 = vsub.s32 0, %v445
    %v448 = vsel %vm446, %v447, %v445
    %v449 = vclz %v448
    %v450 = vsub.s32 %v449, 2
    %vm451 = vcmp.gt.s32.totalorder 0, %v450
    %v452 = vsel %vm451, 0, %v450
    %v453 = vsub.s32 32, %v452
    %v454 = vshll.u32 %v445, %v452
    %v455 = vshrl.u32 %v437, %v453
    %v456 = vor.u32 %v454, %v455
    %v457 = vsub.s32 4294967266, %v452
    %v458 = vadd.s32 %v457, 127
    %v459 = vshll.u32 %v458, 23
    %v460 = vor.u32 4788187, %v459
    %v461 = vand.u32 2147483647, %v460
    %v463 = vcvt.s32.f32 %v456
    %v464 = vmul.f32 %v463, %v461
    %v465 = vxor.u32 %v464, 2147483648
    %v466 = vsel %vm345, %v465, %v464
    %v467 = vsub.s32 4, %v443
    %v468 = vsel %vm345, %v467, %v443
    %v469 = vsel %vm344, %v33, %v466
    %v470 = vsel %vm344, 0, %v468
    %v471 = vmul.f32 %v469, %v469
    %v472 = vmul.f32 %v471, -0.001358992
    %v473 = vadd.f32 %v472, 0.041655596
    %v474 = vmul.f32 %v471, %v473
    %v475 = vadd.f32 %v474, -0.4999988
    %v476 = vmul.f32 %v471, %v475
    %v477 = vadd.f32 1.0, %v476
    %v478 = vmul.f32 %v469, %v469
    %v479 = vmul.f32 %v478, -0.00019511016
    %v480 = vadd.f32 %v479, 0.008332121
    %v481 = vmul.f32 %v478, %v480
    %v482 = vadd.f32 %v481, -0.16666654
    %v483 = vmul.f32 %v478, %v482
    %v484 = vadd.f32 %v483, 1.0
    %v485 = vmul.f32 %v484, %v469
    %vm486 = vweird.f32 %v33
    %v487 = vadd.s32 %v470, 3
    %v488 = vand.u32 %v487, 3
    %vm489 = vcmp.lt.s32.totalorder %v488, 2
    %vm490 = vcmp.eq.s32.totalorder %v488, 0
    %v491 = vxor.u32 %v485, 2147483648
    %v492 = vsel %vm490, %v477, %v491
    %vm493 = vcmp.eq.s32.totalorder %v488, 2
    %v494 = vxor.u32 %v477, 2147483648
    %v495 = vsel %vm493, %v494, %v485
    %v496 = vsel %vm489, %v492, %v495
    %v497 = vsel %vm486, nan, %v496
    %v498 = vand.u32 2147483647, %v34
    %vm499 = vcmp.le.f32.partialorder %v498, 0.7853982
    %vm500 = vcmp.lt.s32.totalorder %v34, 0
    %v501 = vand.u32 %v34, 2139095040
    %v502 = vshrl.u32 %v501, 23
    %v503 = vsub.s32 %v502, 127
    %v504 = vand.u32 2147483647, %v34
    %v505 = vand.u32 %v504, 8388607
    %v506 = vor.u32 %v505, 8388608
    %v507 = vsub.s32 0, %v506
    %v508 = vadd.s32 %v503, 1
    %vm509 = vcmp.gt.s32.totalorder %v508, 0
    %v510 = vsel %vm509, %v508, 0
    %v511 = vshrl.u32 %v510, 5
    %v512 = vand.u32 %v510, 31
    %v513 = vsub.s32 32, %v512
    %v514 = vshrl.u32 683565275, %v513
    %v515 = vshll.u32 683565275, %v512
    %v516 = vshrl.u32 2475754826, %v513
    %v517 = vor.u32 %v515, %v516
    %v518 = vshll.u32 2475754826, %v512
    %v519 = vshrl.u32 2131351028, %v513
    %v520 = vor.u32 %v518, %v519
    %v521 = vshll.u32 2131351028, %v512
    %v522 = vshrl.u32 2102212464, %v513
    %v523 = vor.u32 %v521, %v522
    %v524 = vshll.u32 2102212464, %v512
    %v525 = vshrl.u32 920167782, %v513
    %v526 = vor.u32 %v524, %v525
    %v527 = vshll.u32 920167782, %v512
    %v528 = vshrl.u32 1326507024, %v513
    %v529 = vor.u32 %v527, %v528
    %vm530 = vcmp.lt.s32.totalorder %v511, 1
    %vm531 = vcmp.lt.s32.totalorder %v511, 2
    %vm532 = vcmp.lt.s32.totalorder %v511, 3
    %vm533 = vcmp.lt.s32.totalorder %v511, 4
    %v534 = vsel %vm530, %v514, %v517
    %v535 = vsel %vm533, %v523, 2102212464
    %v536 = vsel %vm532, %v520, %v535
    %v537 = vsel %vm531, %v534, %v536
    %v538 = vsel %vm530, %v517, %v520
    %v539 = vsel %vm533, %v526, 920167782
    %v540 = vsel %vm532, %v523, %v539
    %v541 = vsel %vm531, %v538, %v540
    %v542 = vsel %vm530, %v520, %v523
    %v543 = vsel %vm533, %v529, 1326507024
    %v544 = vsel %vm532, %v526, %v543
    %v545 = vsel %vm531, %v542, %v544
    %v546 = vshll.u32 %v506, 8
    %v547 = vand.u32 %v546, 65535
    %v548 = vshrl.u32 %v546, 16
    %v549 = vand.u32 %v545, 65535
    %v550 = vshrl.u32 %v545, 16
    %v551 = vmul.u32 %v547, %v549
    %v552 = vmul.u32 %v547, %v550
    %v553 = vmul.u32 %v548, %v549
    %v554 = vmul.u32 %v548, %v550
    %v555 = vshll.u32 %v552, 16
    %v556 = vshrl.u32 %v552, 16
    %v557 = vshll.u32 %v553, 16
    %v558 = vshrl.u32 %v553, 16
    %vm559 = vc.u32 %v551, %v555
    %v560 = vsel %vm559, 1, 0
    %v561 = vadd.s32 %v551, %v555
    %v562 = vadd.s32 %v554, %v560
    %vm563 = vc.u32 %v561, %v557
    %v564 = vsel %vm563, 1, 0
    %v565 = vadd.s32 %v561, %v557
    %v566 = vadd.s32 %v562, %v564
    %v567 = vadd.s32 %v566, %v556
    %v568 = vadd.s32 %v567, %v558
    %v569 = vand.u32 %v546, 65535
    %v570 = vshrl.u32 %v546, 16
    %v571 = vand.u32 %v541, 65535
    %v572 = vshrl.u32 %v541, 16
    %v573 = vmul.u32 %v569, %v571
    %v574 = vmul.u32 %v569, %v572
    %v575 = vmul.u32 %v570, %v571
    %v576 = vmul.u32 %v570, %v572
    %v577 = vshll.u32 %v574, 16
    %v578 = vshrl.u32 %v574, 16
    %v579 = vshll.u32 %v575, 16
    %v580 = vshrl.u32 %v575, 16
    %vm581 = vc.u32 %v573, %v577
    %v582 = vsel %vm581, 1, 0
    %v583 = vadd.s32 %v573, %v577
    %v584 = vadd.s32 %v576, %v582
    %vm585 = vc.u32 %v583, %v579
    %v586 = vsel %vm585, 1, 0
    %v587 = vadd.s32 %v583, %v579
    %v588 = vadd.s32 %v584, %v586
    %v589 = vadd.s32 %v588, %v578
    %v590 = vadd.s32 %v589, %v580
    %v591 = vmul.u32 %v546, %v537
    %v592 = vadd.s32 %v568, %v587
    %vm593 = vc.u32 %v568, %v587
    %v594 = vadd.s32 %v590, 1
    %v595 = vsel %vm593, %v594, %v590
    %v596 = vadd.s32 %v591, %v595
    %v597 = vadd.s32 %v596, 536870912
    %v598 = vshrl.u32 %v597, 30
    %v599 = vshll.u32 %v598, 30
    %v600 = vsub.s32 %v596, %v599
    %vm601 = vcmp.lt.s32.totalorder %v600, 0
    %v602 = vsub.s32 0, %v600
    %v603 = vsel %vm601, %v602, %v600
    %v604 = vclz %v603
    %v605 = vsub.s32 %v604, 2
    %vm606 = vcmp.gt.s32.totalorder 0, %v605
    %v607 = vsel %vm606, 0, %v605
    %v608 = vsub.s32 32, %v607
    %v609 = vshll.u32 %v600, %v607
    %v610 = vshrl.u32 %v592, %v608
    %v611 = vor.u32 %v609, %v610
    %v612 = vsub.s32 4294967266, %v607
    %v613 = vadd.s32 %v612, 127
    %v614 = vshll.u32 %v613, 23
    %v615 = vor.u32 4788187, %v614
    %v616 = vand.u32 2147483647, %v615
    %v618 = vcvt.s32.f32 %v611
    %v619 = vmul.f32 %v618, %v616
    %v620 = vxor.u32 %v619, 2147483648
    %v621 = vsel %vm500, %v620, %v619
    %v622 = vsub.s32 4, %v598
    %v623 = vsel %vm500, %v622, %v598
    %v624 = vsel %vm499, %v34, %v621
    %v625 = vsel %vm499, 0, %v623
    %v626 = vmul.f32 %v624, %v624
    %v627 = vmul.f32 %v626, -0.001358992
    %v628 = vadd.f32 %v627, 0.041655596
    %v629 = vmul.f32 %v626, %v628
    %v630 = vadd.f32 %v629, -0.4999988
    %v631 = vmul.f32 %v626, %v630
    %v632 = vadd.f32 1.0, %v631
    %v633 = vmul.f32 %v624, %v624
    %v634 = vmul.f32 %v633, -0.00019511016
    %v635 = vadd.f32 %v634, 0.008332121
    %v636 = vmul.f32 %v633, %v635
    %v637 = vadd.f32 %v636, -0.16666654
    %v638 = vmul.f32 %v633, %v637
    %v639 = vadd.f32 %v638, 1.0
    %v640 = vmul.f32 %v639, %v624
    %vm641 = vweird.f32 %v34
    %v642 = vadd.s32 %v625, 3
    %v643 = vand.u32 %v642, 3
    %vm644 = vcmp.lt.s32.totalorder %v643, 2
    %vm645 = vcmp.eq.s32.totalorder %v643, 0
    %v646 = vxor.u32 %v640, 2147483648
    %v647 = vsel %vm645, %v632, %v646
    %vm648 = vcmp.eq.s32.totalorder %v643, 2
    %v649 = vxor.u32 %v632, 2147483648
    %v650 = vsel %vm648, %v649, %v640
    %v651 = vsel %vm644, %v647, %v650
    %v652 = vsel %vm641, nan, %v651
    %655 = vrot.lane.b32.xlu0 %v188, 16
    %v656 = vpop.permute.xlu0 %655
    %657 = vrot.lane.b32.xlu0 %v342, 16
    %v658 = vpop.permute.xlu0 %657
    %vm661 = vcmask 130048
    %v662 = vsel %vm661, %v188, %v656
    %v663 = vsel %vm661, %v342, %v658
    %vm664 = vcmask 261120
    %665 = vst.msk [vmem:[#allocation2] sm:$0xff] %vm664, %v662
    %666 = vst.msk [vmem:[#allocation2 + $0x8] sm:$0xff] %vm664, %v663
    %669 = vrot.lane.b32.xlu0 %v497, 16
    %v670 = vpop.permute.xlu0 %669
    %671 = vrot.lane.b32.xlu0 %v652, 16
    %v672 = vpop.permute.xlu0 %671
    %v675 = vsel %vm661, %v497, %v670
    %v676 = vsel %vm661, %v652, %v672
    %677 = vst.msk [vmem:[#allocation4] sm:$0xff] %vm664, %v675
    %678 = vst.msk [vmem:[#allocation4 + $0x8] sm:$0xff] %vm664, %v676
    // Predicated region
    $region10: #{tpu_custom_call.1} parent=1 // pred_check
      _
    $region11: #{tpu_custom_call.1} parent=1 // pred_check_branch
      %680 = sbr.rel (0) target = $region13
    $region12: #{tpu_custom_call.1} parent=1 // pred_region
      %682 = vsyncadd [#allocation3], 0
      %s683 = sshll.u32 [#allocation2], 4
      %s684 = int_to_ptr.vmem [resolvable:$true] %s683
      %s685 = sshll.u32 %s2, 4
      %s686 = int_to_ptr.hbm [resolvable:$true] %s685
      %691 = dma.vmem_to_hbm [thread:$0]  %s684, 256, %s686, [#allocation3], 128, 128, 8
    $region13: #{tpu_custom_call.1} parent=1 // pred_fallthru
      _
    // Predicated region
    $region14: #{tpu_custom_call.1} parent=1 // pred_check
      _
    $region15: #{tpu_custom_call.1} parent=1 // pred_check_branch
      %693 = sbr.rel (0) target = $region17
    $region16: #{tpu_custom_call.1} parent=1 // pred_region
      %695 = vsyncadd [#allocation5], 0
      %s696 = sshll.u32 [#allocation4], 4
      %s697 = int_to_ptr.vmem [resolvable:$true] %s696
      %s698 = sshll.u32 %s3, 4
      %s699 = int_to_ptr.hbm [resolvable:$true] %s698
      %704 = dma.vmem_to_hbm [thread:$0]  %s697, 256, %s699, [#allocation5], 128, 128, 8
    $region17: #{tpu_custom_call.1} parent=1 // pred_fallthru
      _
    // Predicated region
    $region18: #{tpu_custom_call.1} parent=1 // pred_check
      _
    $region19: #{tpu_custom_call.1} parent=1 // pred_check_branch
      %706 = sbr.rel (0) target = $region21
    $region20: #{tpu_custom_call.1} parent=1 // pred_region
      %708 = dma.done [#allocation3], 256
    $region21: #{tpu_custom_call.1} parent=1 // pred_fallthru
      _
    // Predicated region
    $region22: #{tpu_custom_call.1} parent=1 // pred_check
      _
    $region23: #{tpu_custom_call.1} parent=1 // pred_check_branch
      %710 = sbr.rel (0) target = $region25
    $region24: #{tpu_custom_call.1} parent=1 // pred_region
      %712 = dma.done [#allocation5], 256
    $region25: #{tpu_custom_call.1} parent=1 // pred_fallthru
      _
    %713 = vsyncpa [#allocation3], 1
    %714 = vsyncpa [#allocation5], 1

</llo_original>
